<compile_context>
chip_gen: v7x
topology: tpu7x:2x2x1
jax: 0.10.0
libtpu: 0.0.40
codegen_flags: <defaults>
</compile_context>

<pallas_src>
import functools

import jax
import jax.numpy as jnp
from jax import lax
from jax.experimental import pallas as pl
from jax.experimental.pallas import tpu as pltpu


def spatial_gcn_kernel(x_ref, wkqv_ref, bkqv_ref, wg_ref, bg_ref,
                       wo_ref, bo_ref, out_ref):
    # x_ref block: (TB, P, N) -- TB batch elements, channels on sublanes,
    # flattened spatial on lanes.
    tb, p, n = x_ref.shape
    c3 = wkqv_ref.shape[0]
    c = c3 // 3

    # Load weights once per grid step (already in the orientation the MXU needs).
    wkqv = wkqv_ref[...]                               # (3c, P)  wk|wq|wv fused
    wg = wg_ref[...]                                   # (c, c)   BN1d folded
    wo = wo_ref[...]                                   # (P, c)   BN2d folded

    # Hoist bias lane-broadcasts out of the per-batch loop
    # (JAX does not CSE broadcast_in_dim).
    bkqv = jnp.broadcast_to(bkqv_ref[...], (c3, n))    # (3c, N)
    bg = jnp.broadcast_to(bg_ref[...], (c, n))         # (c, N)
    bo = jnp.broadcast_to(bo_ref[...], (p, n))         # (P, N)

    for bi in range(tb):          # TB is small and static -> unrolled
        xb = x_ref[bi]                                 # (P, N)

        # Fused k/q/v 1x1-conv projections: one MXU pass (3c, P) @ (P, N).
        kqv = jnp.dot(wkqv, xb, preferred_element_type=jnp.float32) + bkqv
        k = kqv[0 * c:1 * c]                           # (c, N)
        q = kqv[1 * c:2 * c]                           # (c, N)
        v = kqv[2 * c:3 * c]                           # (c, N)

        # Affinity A[i, j] = sum_n q[i, n] * v[j, n]  (== torch.bmm(node_q, node_v)).
        a = lax.dot_general(q, v, (((1,), (1,)), ((), ())),
                            preferred_element_type=jnp.float32)     # (c, c)

        # Softmax over the last dim (dim=2 in torch); divide on the EUP.
        a = a - jnp.max(a, axis=-1, keepdims=True)
        e = jnp.exp(a)
        a = e * pl.reciprocal(jnp.sum(e, axis=-1, keepdims=True), approx=True)

        # (node_k @ A)^T kept channels-on-sublane: av[j, n] = sum_i A[i, j] k[i, n].
        av = lax.dot_general(a, k, (((0,), (0,)), ((), ())),
                             preferred_element_type=jnp.float32)    # (c, N)

        # conv_wg (1x1 Conv1d, no bias) with BatchNorm1d folded in.
        avw = jnp.dot(wg, av, preferred_element_type=jnp.float32) + bg   # (c, N)

        # out 1x1 Conv2d with BatchNorm2d folded in, residual + ReLU.
        y = jnp.dot(wo, avw, preferred_element_type=jnp.float32) + bo    # (P, N)
        out_ref[bi] = jnp.maximum(y + xb, 0.0)


def spatial_gcn_forward(x_nchw, params, *, eps=1e-5, max_batch_block=8):
    b, p, h, w = x_nchw.shape
    n = h * w
    c = params["wk"].shape[0]

    # NCHW -> (B, P, N): pure reshape (no transpose); channels land on
    # sublanes, flattened spatial on lanes.
    x = x_nchw.reshape(b, p, n).astype(jnp.float32)

    # Fuse the three projection 1x1 convs into one weight / bias.
    w_kqv = jnp.concatenate(
        [params["wk"], params["wq"], params["wv"]], axis=0)               # (3c, P)
    b_kqv = jnp.concatenate(
        [params["bk"], params["bq"], params["bv"]], axis=0).reshape(3 * c, 1)

    # Fold eval-mode BatchNorms into the adjacent 1x1 convs.
    sg = params["gamma_g"] / jnp.sqrt(params["var_g"] + eps)
    wg_f = params["wg"] * sg[:, None]                                     # (c, c)
    bg_f = (params["beta_g"] - params["mean_g"] * sg).reshape(c, 1)

    so = params["gamma_o"] / jnp.sqrt(params["var_o"] + eps)
    wo_f = params["wo"] * so[:, None]                                     # (P, c)
    bo_f = (params["bo"] * so + params["beta_o"]
            - params["mean_o"] * so).reshape(p, 1)

    # Block several batch elements per grid step to amortize per-step overhead.
    tb = max(d for d in range(1, min(b, max_batch_block) + 1) if b % d == 0)
    grid = (b // tb,)

    out = pl.pallas_call(
        spatial_gcn_kernel,
        out_shape=jax.ShapeDtypeStruct((b, p, n), jnp.float32),
        grid_spec=pltpu.PrefetchScalarGridSpec(
            num_scalar_prefetch=0,
            grid=grid,
            in_specs=[
                pl.BlockSpec((tb, p, n), lambda i: (i, 0, 0)),   # x (B,P,N)
                pl.BlockSpec((3 * c, p), lambda i: (0, 0)),      # fused wk|wq|wv
                pl.BlockSpec((3 * c, 1), lambda i: (0, 0)),      # fused bk|bq|bv
                pl.BlockSpec((c, c), lambda i: (0, 0)),          # wg (BN folded)
                pl.BlockSpec((c, 1), lambda i: (0, 0)),          # bg (BN folded)
                pl.BlockSpec((p, c), lambda i: (0, 0)),          # wo (BN folded)
                pl.BlockSpec((p, 1), lambda i: (0, 0)),          # bo (BN folded)
            ],
            out_specs=pl.BlockSpec((tb, p, n), lambda i: (i, 0, 0)),
        ),
        compiler_params=pltpu.CompilerParams(
            dimension_semantics=("parallel",),
            vmem_limit_bytes=64 * 1024 * 1024,
        ),
    )(x, w_kqv, b_kqv, wg_f, bg_f, wo_f, bo_f)

    # (B, P, N) -> NCHW: pure reshape, no transpose.
    return out.reshape(b, p, h, w)


def reference_forward(x_nchw, params, *, eps=1e-5):
    """Pure-JAX reference mirroring the PyTorch forward (eval-mode BN)."""
    b, p, h, w = x_nchw.shape
    n = h * w
    x = jnp.transpose(x_nchw, (0, 2, 3, 1)).reshape(b, n, p).astype(jnp.float32)

    k = jnp.einsum("bnp,cp->bnc", x, params["wk"]) + params["bk"]
    q = jnp.einsum("bnp,cp->bnc", x, params["wq"]) + params["bq"]
    v = jnp.einsum("bnp,cp->bnc", x, params["wv"]) + params["bv"]

    a = jnp.einsum("bni,bnj->bij", q, v)           # torch.bmm(node_q, node_v)
    a = jax.nn.softmax(a, axis=-1)
    av = jnp.einsum("bni,bij->bnj", k, a)          # torch.bmm(node_k, A)

    avw = jnp.einsum("bnc,dc->bnd", av, params["wg"])
    sg = params["gamma_g"] / jnp.sqrt(params["var_g"] + eps)
    avw = (avw - params["mean_g"]) * sg + params["beta_g"]

    y = jnp.einsum("bnc,pc->bnp", avw, params["wo"]) + params["bo"]
    so = params["gamma_o"] / jnp.sqrt(params["var_o"] + eps)
    y = (y - params["mean_o"]) * so + params["beta_o"]

    out = jnp.maximum(y + x, 0.0)
    return jnp.transpose(out.reshape(b, h, w, p), (0, 3, 1, 2))


def make_params(key, plane):
    c = plane // 2
    ks = jax.random.split(key, 12)
    f32 = jnp.float32
    params = {
        "wk": 0.2 * jax.random.normal(ks[0], (c, plane), f32),
        "bk": 0.1 * jax.random.normal(ks[1], (c,), f32),
        "wq": 0.2 * jax.random.normal(ks[2], (c, plane), f32),
        "bq": 0.1 * jax.random.normal(ks[3], (c,), f32),
        "wv": 0.2 * jax.random.normal(ks[4], (c, plane), f32),
        "bv": 0.1 * jax.random.normal(ks[5], (c,), f32),
        "wg": 0.2 * jax.random.normal(ks[6], (c, c), f32),
        "gamma_g": 1.0 + 0.1 * jax.random.normal(ks[7], (c,), f32),
        "beta_g": 0.1 * jax.random.normal(ks[8], (c,), f32),
        "mean_g": jnp.zeros((c,), f32),
        "var_g": jnp.ones((c,), f32),
        "wo": 0.2 * jax.random.normal(ks[9], (plane, c), f32),
        "bo": 0.1 * jax.random.normal(ks[10], (plane,), f32),
        "gamma_o": jnp.ones((plane,), f32),
        "beta_o": jnp.zeros((plane,), f32),
        "mean_o": jnp.zeros((plane,), f32),
        "var_o": jnp.ones((plane,), f32),
    }
    return params


if __name__ == "__main__":
    B, PLANE, H, W = 2, 8, 16, 16
    key = jax.random.PRNGKey(0)
    kx, kp = jax.random.split(key)
    x = jax.random.normal(kx, (B, PLANE, H, W), jnp.float32)
    params = make_params(kp, PLANE)

    fwd = jax.jit(functools.partial(spatial_gcn_forward))
    out = fwd(x, params)
    out = jax.block_until_ready(out)

    ref = reference_forward(x, params)
    assert out.shape == (B, PLANE, H, W)
    assert jnp.all(jnp.isfinite(out))
    assert jnp.allclose(out, ref, rtol=1e-2, atol=1e-2), (
        float(jnp.max(jnp.abs(out - ref))))

    print("KERNEL_OK")
</pallas_src>

<mosaic_0001>
module attributes {stable_mosaic.version = 11 : i64} {
  func.func @spatial_gcn_kernel(%arg0: i32, %arg1: memref<2x8x256xf32, #tpu.memory_space<vmem>>, %arg2: memref<12x8xf32, #tpu.memory_space<vmem>>, %arg3: memref<12x1xf32, #tpu.memory_space<vmem>>, %arg4: memref<4x4xf32, #tpu.memory_space<vmem>>, %arg5: memref<4x1xf32, #tpu.memory_space<vmem>>, %arg6: memref<8x4xf32, #tpu.memory_space<vmem>>, %arg7: memref<8x1xf32, #tpu.memory_space<vmem>>, %arg8: memref<2x8x256xf32, #tpu.memory_space<vmem>>) attributes {dimension_semantics = [#tpu.dimension_semantics<parallel>], iteration_bounds = array<i64: 1>, scalar_prefetch = 0 : i64, scratch_operands = 0 : i64, tpu.core_type = #tpu.core_type<tc>, window_params = [{transform_indices = @transform_0, window_bounds = array<i64: 2, 8, 256>}, {pipeline_mode = #tpu.pipeline_mode<synchronous>, transform_indices = @transform_1, window_bounds = array<i64: 12, 8>}, {pipeline_mode = #tpu.pipeline_mode<synchronous>, transform_indices = @transform_2, window_bounds = array<i64: 12, 1>}, {pipeline_mode = #tpu.pipeline_mode<synchronous>, transform_indices = @transform_3, window_bounds = array<i64: 4, 4>}, {pipeline_mode = #tpu.pipeline_mode<synchronous>, transform_indices = @transform_4, window_bounds = array<i64: 4, 1>}, {pipeline_mode = #tpu.pipeline_mode<synchronous>, transform_indices = @transform_5, window_bounds = array<i64: 8, 4>}, {pipeline_mode = #tpu.pipeline_mode<synchronous>, transform_indices = @transform_6, window_bounds = array<i64: 8, 1>}, {transform_indices = @transform_7, window_bounds = array<i64: 2, 8, 256>}]} {
    %c0 = arith.constant 0 : index
    %c0_0 = arith.constant 0 : index
    %0 = vector.load %arg2[%c0, %c0_0] : memref<12x8xf32, #tpu.memory_space<vmem>>, vector<12x8xf32>
    %c0_1 = arith.constant 0 : index
    %c0_2 = arith.constant 0 : index
    %1 = vector.load %arg4[%c0_1, %c0_2] : memref<4x4xf32, #tpu.memory_space<vmem>>, vector<4x4xf32>
    %c0_3 = arith.constant 0 : index
    %c0_4 = arith.constant 0 : index
    %2 = vector.load %arg6[%c0_3, %c0_4] : memref<8x4xf32, #tpu.memory_space<vmem>>, vector<8x4xf32>
    %c0_5 = arith.constant 0 : index
    %c0_6 = arith.constant 0 : index
    %3 = vector.load %arg3[%c0_5, %c0_6] : memref<12x1xf32, #tpu.memory_space<vmem>>, vector<12x1xf32>
    %4 = vector.shape_cast %3 : vector<12x1xf32> to vector<12x1xf32>
    %5 = vector.broadcast %4 : vector<12x1xf32> to vector<12x256xf32>
    %c0_7 = arith.constant 0 : index
    %c0_8 = arith.constant 0 : index
    %6 = vector.load %arg5[%c0_7, %c0_8] : memref<4x1xf32, #tpu.memory_space<vmem>>, vector<4x1xf32>
    %7 = vector.shape_cast %6 : vector<4x1xf32> to vector<4x1xf32>
    %8 = vector.broadcast %7 : vector<4x1xf32> to vector<4x256xf32>
    %c0_9 = arith.constant 0 : index
    %c0_10 = arith.constant 0 : index
    %9 = vector.load %arg7[%c0_9, %c0_10] : memref<8x1xf32, #tpu.memory_space<vmem>>, vector<8x1xf32>
    %10 = vector.shape_cast %9 : vector<8x1xf32> to vector<8x1xf32>
    %11 = vector.broadcast %10 : vector<8x1xf32> to vector<8x256xf32>
    %c0_11 = arith.constant 0 : index
    %c0_12 = arith.constant 0 : index
    %c0_13 = arith.constant 0 : index
    %12 = vector.load %arg1[%c0_11, %c0_12, %c0_13] : memref<2x8x256xf32, #tpu.memory_space<vmem>>, vector<1x8x256xf32>
    %13 = vector.shape_cast %12 : vector<1x8x256xf32> to vector<8x256xf32>
    %cst = arith.constant dense<0.000000e+00> : vector<12x256xf32>
    %14 = tpu.matmul %0, %13, %cst {dimension_numbers = #tpu.dot_dimension_numbers<[1], [0], [0], [1], [0, 0, 1, 1], [], []>} : vector<12x8xf32>, vector<8x256xf32>, vector<12x256xf32> -> vector<12x256xf32>
    %15 = arith.addf %14, %5 : vector<12x256xf32>
    %16 = vector.extract_strided_slice %15 {offsets = [0, 0], sizes = [4, 256], strides = [1, 1]} : vector<12x256xf32> to vector<4x256xf32>
    %17 = vector.extract_strided_slice %15 {offsets = [4, 0], sizes = [4, 256], strides = [1, 1]} : vector<12x256xf32> to vector<4x256xf32>
    %18 = vector.extract_strided_slice %15 {offsets = [8, 0], sizes = [4, 256], strides = [1, 1]} : vector<12x256xf32> to vector<4x256xf32>
    %cst_14 = arith.constant dense<0.000000e+00> : vector<4x4xf32>
    %19 = tpu.matmul %17, %18, %cst_14 {dimension_numbers = #tpu.dot_dimension_numbers<[1], [1], [0], [0], [0, 0, 1, 0], [], []>} : vector<4x256xf32>, vector<4x256xf32>, vector<4x4xf32> -> vector<4x4xf32>
    %cst_15 = arith.constant dense<0xFF800000> : vector<4xf32>
    %20 = vector.multi_reduction <maximumf>, %19, %cst_15 [1] : vector<4x4xf32> to vector<4xf32>
    %21 = vector.shape_cast %20 : vector<4xf32> to vector<4x1xf32>
    %22 = vector.broadcast %21 : vector<4x1xf32> to vector<4x4xf32>
    %23 = arith.subf %19, %22 : vector<4x4xf32>
    %24 = math.exp %23 : vector<4x4xf32>
    %cst_16 = arith.constant dense<0.000000e+00> : vector<4xf32>
    %25 = vector.multi_reduction <add>, %24, %cst_16 [1] : vector<4x4xf32> to vector<4xf32>
    %26 = vector.shape_cast %25 : vector<4xf32> to vector<4x1xf32>
    %27 = tpu.reciprocal %26 {approx = true} : vector<4x1xf32> -> vector<4x1xf32>
    %28 = vector.broadcast %27 : vector<4x1xf32> to vector<4x4xf32>
    %29 = arith.mulf %24, %28 : vector<4x4xf32>
    %cst_17 = arith.constant dense<0.000000e+00> : vector<4x256xf32>
    %30 = tpu.matmul %29, %16, %cst_17 {dimension_numbers = #tpu.dot_dimension_numbers<[0], [0], [1], [1], [0, 1, 1, 1], [], []>} : vector<4x4xf32>, vector<4x256xf32>, vector<4x256xf32> -> vector<4x256xf32>
    %cst_18 = arith.constant dense<0.000000e+00> : vector<4x256xf32>
    %31 = tpu.matmul %1, %30, %cst_18 {dimension_numbers = #tpu.dot_dimension_numbers<[1], [0], [0], [1], [0, 0, 1, 1], [], []>} : vector<4x4xf32>, vector<4x256xf32>, vector<4x256xf32> -> vector<4x256xf32>
    %32 = arith.addf %31, %8 : vector<4x256xf32>
    %cst_19 = arith.constant dense<0.000000e+00> : vector<8x256xf32>
    %33 = tpu.matmul %2, %32, %cst_19 {dimension_numbers = #tpu.dot_dimension_numbers<[1], [0], [0], [1], [0, 0, 1, 1], [], []>} : vector<8x4xf32>, vector<4x256xf32>, vector<8x256xf32> -> vector<8x256xf32>
    %34 = arith.addf %33, %11 : vector<8x256xf32>
    %35 = arith.addf %34, %13 : vector<8x256xf32>
    %cst_20 = arith.constant 0.000000e+00 : f32
    %36 = vector.broadcast %cst_20 : f32 to vector<8x256xf32>
    %37 = arith.maximumf %35, %36 : vector<8x256xf32>
    %c0_21 = arith.constant 0 : index
    %c0_22 = arith.constant 0 : index
    %c0_23 = arith.constant 0 : index
    %38 = vector.load %arg8[%c0_21, %c0_22, %c0_23] : memref<2x8x256xf32, #tpu.memory_space<vmem>>, vector<1x8x256xf32>
    %39 = vector.shape_cast %38 : vector<1x8x256xf32> to vector<8x256xf32>
    %40 = vector.shape_cast %37 : vector<8x256xf32> to vector<1x8x256xf32>
    tpu.vector_store %arg8[%c0_21, %c0_22, %c0_23], %40 {strides = array<i32>} : memref<2x8x256xf32, #tpu.memory_space<vmem>>, vector<1x8x256xf32>,
    %c1 = arith.constant 1 : index
    %c0_24 = arith.constant 0 : index
    %c0_25 = arith.constant 0 : index
    %41 = vector.load %arg1[%c1, %c0_24, %c0_25] : memref<2x8x256xf32, #tpu.memory_space<vmem>>, vector<1x8x256xf32>
    %42 = vector.shape_cast %41 : vector<1x8x256xf32> to vector<8x256xf32>
    %cst_26 = arith.constant dense<0.000000e+00> : vector<12x256xf32>
    %43 = tpu.matmul %0, %42, %cst_26 {dimension_numbers = #tpu.dot_dimension_numbers<[1], [0], [0], [1], [0, 0, 1, 1], [], []>} : vector<12x8xf32>, vector<8x256xf32>, vector<12x256xf32> -> vector<12x256xf32>
    %44 = arith.addf %43, %5 : vector<12x256xf32>
    %45 = vector.extract_strided_slice %44 {offsets = [0, 0], sizes = [4, 256], strides = [1, 1]} : vector<12x256xf32> to vector<4x256xf32>
    %46 = vector.extract_strided_slice %44 {offsets = [4, 0], sizes = [4, 256], strides = [1, 1]} : vector<12x256xf32> to vector<4x256xf32>
    %47 = vector.extract_strided_slice %44 {offsets = [8, 0], sizes = [4, 256], strides = [1, 1]} : vector<12x256xf32> to vector<4x256xf32>
    %cst_27 = arith.constant dense<0.000000e+00> : vector<4x4xf32>
    %48 = tpu.matmul %46, %47, %cst_27 {dimension_numbers = #tpu.dot_dimension_numbers<[1], [1], [0], [0], [0, 0, 1, 0], [], []>} : vector<4x256xf32>, vector<4x256xf32>, vector<4x4xf32> -> vector<4x4xf32>
    %cst_28 = arith.constant dense<0xFF800000> : vector<4xf32>
    %49 = vector.multi_reduction <maximumf>, %48, %cst_28 [1] : vector<4x4xf32> to vector<4xf32>
    %50 = vector.shape_cast %49 : vector<4xf32> to vector<4x1xf32>
    %51 = vector.broadcast %50 : vector<4x1xf32> to vector<4x4xf32>
    %52 = arith.subf %48, %51 : vector<4x4xf32>
    %53 = math.exp %52 : vector<4x4xf32>
    %cst_29 = arith.constant dense<0.000000e+00> : vector<4xf32>
    %54 = vector.multi_reduction <add>, %53, %cst_29 [1] : vector<4x4xf32> to vector<4xf32>
    %55 = vector.shape_cast %54 : vector<4xf32> to vector<4x1xf32>
    %56 = tpu.reciprocal %55 {approx = true} : vector<4x1xf32> -> vector<4x1xf32>
    %57 = vector.broadcast %56 : vector<4x1xf32> to vector<4x4xf32>
    %58 = arith.mulf %53, %57 : vector<4x4xf32>
    %cst_30 = arith.constant dense<0.000000e+00> : vector<4x256xf32>
    %59 = tpu.matmul %58, %45, %cst_30 {dimension_numbers = #tpu.dot_dimension_numbers<[0], [0], [1], [1], [0, 1, 1, 1], [], []>} : vector<4x4xf32>, vector<4x256xf32>, vector<4x256xf32> -> vector<4x256xf32>
    %cst_31 = arith.constant dense<0.000000e+00> : vector<4x256xf32>
    %60 = tpu.matmul %1, %59, %cst_31 {dimension_numbers = #tpu.dot_dimension_numbers<[1], [0], [0], [1], [0, 0, 1, 1], [], []>} : vector<4x4xf32>, vector<4x256xf32>, vector<4x256xf32> -> vector<4x256xf32>
    %61 = arith.addf %60, %8 : vector<4x256xf32>
    %cst_32 = arith.constant dense<0.000000e+00> : vector<8x256xf32>
    %62 = tpu.matmul %2, %61, %cst_32 {dimension_numbers = #tpu.dot_dimension_numbers<[1], [0], [0], [1], [0, 0, 1, 1], [], []>} : vector<8x4xf32>, vector<4x256xf32>, vector<8x256xf32> -> vector<8x256xf32>
    %63 = arith.addf %62, %11 : vector<8x256xf32>
    %64 = arith.addf %63, %42 : vector<8x256xf32>
    %cst_33 = arith.constant 0.000000e+00 : f32
    %65 = vector.broadcast %cst_33 : f32 to vector<8x256xf32>
    %66 = arith.maximumf %64, %65 : vector<8x256xf32>
    %c1_34 = arith.constant 1 : index
    %c0_35 = arith.constant 0 : index
    %c0_36 = arith.constant 0 : index
    %67 = vector.load %arg8[%c1_34, %c0_35, %c0_36] : memref<2x8x256xf32, #tpu.memory_space<vmem>>, vector<1x8x256xf32>
    %68 = vector.shape_cast %67 : vector<1x8x256xf32> to vector<8x256xf32>
    %69 = vector.shape_cast %66 : vector<8x256xf32> to vector<1x8x256xf32>
    tpu.vector_store %arg8[%c1_34, %c0_35, %c0_36], %69 {strides = array<i32>} : memref<2x8x256xf32, #tpu.memory_space<vmem>>, vector<1x8x256xf32>,
    return
  }
  func.func @transform_0(%arg0: i32) -> (i32, i32, i32) {
    %c0_i32 = arith.constant 0 : i32
    %c0_i32_0 = arith.constant 0 : i32
    %c0_i32_1 = arith.constant 0 : i32
    return %arg0, %c0_i32, %c0_i32_0 : i32, i32, i32
  }
  func.func @transform_1(%arg0: i32) -> (i32, i32) {
    %c0_i32 = arith.constant 0 : i32
    %c0_i32_0 = arith.constant 0 : i32
    %c0_i32_1 = arith.constant 0 : i32
    return %c0_i32, %c0_i32_0 : i32, i32
  }
  func.func @transform_2(%arg0: i32) -> (i32, i32) {
    %c0_i32 = arith.constant 0 : i32
    %c0_i32_0 = arith.constant 0 : i32
    %c0_i32_1 = arith.constant 0 : i32
    return %c0_i32, %c0_i32_0 : i32, i32
  }
  func.func @transform_3(%arg0: i32) -> (i32, i32) {
    %c0_i32 = arith.constant 0 : i32
    %c0_i32_0 = arith.constant 0 : i32
    %c0_i32_1 = arith.constant 0 : i32
    return %c0_i32, %c0_i32_0 : i32, i32
  }
  func.func @transform_4(%arg0: i32) -> (i32, i32) {
    %c0_i32 = arith.constant 0 : i32
    %c0_i32_0 = arith.constant 0 : i32
    %c0_i32_1 = arith.constant 0 : i32
    return %c0_i32, %c0_i32_0 : i32, i32
  }
  func.func @transform_5(%arg0: i32) -> (i32, i32) {
    %c0_i32 = arith.constant 0 : i32
    %c0_i32_0 = arith.constant 0 : i32
    %c0_i32_1 = arith.constant 0 : i32
    return %c0_i32, %c0_i32_0 : i32, i32
  }
  func.func @transform_6(%arg0: i32) -> (i32, i32) {
    %c0_i32 = arith.constant 0 : i32
    %c0_i32_0 = arith.constant 0 : i32
    %c0_i32_1 = arith.constant 0 : i32
    return %c0_i32, %c0_i32_0 : i32, i32
  }
  func.func @transform_7(%arg0: i32) -> (i32, i32, i32) {
    %c0_i32 = arith.constant 0 : i32
    %c0_i32_0 = arith.constant 0 : i32
    %c0_i32_1 = arith.constant 0 : i32
    return %arg0, %c0_i32, %c0_i32_0 : i32, i32, i32
  }
}

</mosaic_0001>

<llo_original>
// kernel: spatial_gcn_forward.1
$region0: #{spatial_gcn_forward.1}
  #allocation0 [shape = 'u32[]', space=smem, size = 0x4, offset = 0x4, fixed_abs, tag = 'smem constant byte address 0x4 - core index']
  #allocation1 [shape = 'u32[144,128]{1,0:T(1,128)}', space=vmem, size = 0x12000, scoped, tag = 'internal scratch']
  %s0 = inlined_call_operand.hbm [shape: f32[2,8,256], index: 0, kind: input, shape index: {}]
  %s1 = inlined_call_operand.hbm [shape: f32[12,8], index: 1, kind: input, shape index: {}]
  %s2 = inlined_call_operand.hbm [shape: f32[12,1], index: 2, kind: input, shape index: {}]
  %s3 = inlined_call_operand.hbm [shape: f32[4,4], index: 3, kind: input, shape index: {}]
  %s4 = inlined_call_operand.hbm [shape: f32[4,1], index: 4, kind: input, shape index: {}]
  %s5 = inlined_call_operand.hbm [shape: f32[8,4], index: 5, kind: input, shape index: {}]
  %s6 = inlined_call_operand.hbm [shape: f32[8,1], index: 6, kind: input, shape index: {}]
  %s7 = inlined_call_operand.hbm [shape: f32[2,8,256], index: 7, kind: output, shape index: {}]
  %s8 = sld [smem:[#allocation0]]
  $region66: #{spatial_gcn_forward.1} parent=0
    _
  %s10 = ssub.s32 1, %s8
  %s11 = scalar_select 0, %s10, %s8
  $region1: #{spatial_gcn_forward.1} parent=0
    #allocation2 [shape = 'u8[16384]{0}', space=vmem, size = 0x4000, scoped, tag = 'input window, operand 0, single buffered']
    #allocation3 [shape = 's32[1]{0}', space=sflag, size = 0x4, scoped, tag = 'scoped memory for spatial_gcn_forward.1']
    #allocation4 [shape = 's32[1]{0}', space=sflag, size = 0x4, scoped, tag = 'scoped memory for spatial_gcn_forward.1']
    #allocation5 [shape = 'u8[8192]{0}', space=vmem, size = 0x2000, scoped, tag = 'input window, operand 1, single buffered']
    #allocation6 [shape = 's32[1]{0}', space=sflag, size = 0x4, scoped, tag = 'scoped memory for spatial_gcn_forward.1']
    #allocation7 [shape = 'u8[8192]{0}', space=vmem, size = 0x2000, scoped, tag = 'input window, operand 2, single buffered']
    #allocation8 [shape = 'u8[2048]{0}', space=vmem, size = 0x800, scoped, tag = 'input window, operand 3, single buffered']
    #allocation9 [shape = 's32[1]{0}', space=sflag, size = 0x4, scoped, tag = 'scoped memory for spatial_gcn_forward.1']
    #allocation10 [shape = 'u8[2048]{0}', space=vmem, size = 0x800, scoped, tag = 'input window, operand 4, single buffered']
    #allocation11 [shape = 'u8[4096]{0}', space=vmem, size = 0x1000, scoped, tag = 'input window, operand 5, single buffered']
    #allocation12 [shape = 's32[1]{0}', space=sflag, size = 0x4, scoped, tag = 'scoped memory for spatial_gcn_forward.1']
    #allocation13 [shape = 'u8[4096]{0}', space=vmem, size = 0x1000, scoped, tag = 'input window, operand 6, single buffered']
    #allocation14 [shape = 'u8[16384]{0}', space=vmem, size = 0x4000, scoped, tag = 'output window, operand 0, single buffered']
    %12 = vsyncpa [#allocation3], 0
    %13 = vsyncpa [#allocation6], 0
    %14 = vsyncpa [#allocation9], 0
    %15 = vsyncpa [#allocation12], 0
    %16 = vsyncpa [#allocation4], 0
    // Predicated region
    $region2: #{spatial_gcn_forward.1} parent=1 // pred_check
      _
    $region3: #{spatial_gcn_forward.1} parent=1 // pred_check_branch
      %18 = sbr.rel (0) target = $region5
    $region4: #{spatial_gcn_forward.1} parent=1 // pred_region
      %s20 = ssub.s32 512, 512
      %21 = vsyncadd [#allocation3], %s20
      %s22 = sshll.u32 [#allocation2], 4
      %s23 = int_to_ptr.vmem [resolvable:$true] %s22
      %28 = dma.hbm_to_vmem [thread:$0]  %s0, 512, %s23, [#allocation3], 256, 256, 16
    $region5: #{spatial_gcn_forward.1} parent=1 // pred_fallthru
      _
    // Predicated region
    $region6: #{spatial_gcn_forward.1} parent=1 // pred_check
      _
    $region7: #{spatial_gcn_forward.1} parent=1 // pred_check_branch
      %30 = sbr.rel (0) target = $region9
    $region8: #{spatial_gcn_forward.1} parent=1 // pred_region
      %s32 = ssub.s32 256, 256
      %33 = vsyncadd [#allocation6], %s32
      %s34 = sshll.u32 [#allocation5], 4
      %s35 = int_to_ptr.vmem [resolvable:$true] %s34
      %40 = dma.hbm_to_vmem [thread:$0]  %s1, 256, %s35, [#allocation6], 128, 128, 8
    $region9: #{spatial_gcn_forward.1} parent=1 // pred_fallthru
      _
    // Predicated region
    $region10: #{spatial_gcn_forward.1} parent=1 // pred_check
      _
    $region11: #{spatial_gcn_forward.1} parent=1 // pred_check_branch
      %42 = sbr.rel (0) target = $region13
    $region12: #{spatial_gcn_forward.1} parent=1 // pred_region
      %s44 = ssub.s32 256, 256
      %45 = vsyncadd [#allocation6], %s44
      %s46 = sshll.u32 [#allocation7], 4
      %s47 = int_to_ptr.vmem [resolvable:$true] %s46
      %52 = dma.hbm_to_vmem [thread:$0]  %s2, 256, %s47, [#allocation6], 128, 128, 8
    $region13: #{spatial_gcn_forward.1} parent=1 // pred_fallthru
      _
    // Predicated region
    $region14: #{spatial_gcn_forward.1} parent=1 // pred_check
      _
    $region15: #{spatial_gcn_forward.1} parent=1 // pred_check_branch
      %54 = sbr.rel (0) target = $region17
    $region16: #{spatial_gcn_forward.1} parent=1 // pred_region
      %s56 = ssub.s32 64, 64
      %57 = vsyncadd [#allocation9], %s56
      %s59 = sshll.u32 [#allocation8], 4
      %s60 = int_to_ptr.vmem [resolvable:$true] %s59
      %62 = dma.hbm_to_vmem [thread:$0]  %s3, 64, %s60, [#allocation9]
    $region17: #{spatial_gcn_forward.1} parent=1 // pred_fallthru
      _
    // Predicated region
    $region18: #{spatial_gcn_forward.1} parent=1 // pred_check
      _
    $region19: #{spatial_gcn_forward.1} parent=1 // pred_check_branch
      %64 = sbr.rel (0) target = $region21
    $region20: #{spatial_gcn_forward.1} parent=1 // pred_region
      %s66 = ssub.s32 64, 64
      %67 = vsyncadd [#allocation9], %s66
      %s69 = sshll.u32 [#allocation10], 4
      %s70 = int_to_ptr.vmem [resolvable:$true] %s69
      %72 = dma.hbm_to_vmem [thread:$0]  %s4, 64, %s70, [#allocation9]
    $region21: #{spatial_gcn_forward.1} parent=1 // pred_fallthru
      _
    // Predicated region
    $region22: #{spatial_gcn_forward.1} parent=1 // pred_check
      _
    $region23: #{spatial_gcn_forward.1} parent=1 // pred_check_branch
      %74 = sbr.rel (0) target = $region25
    $region24: #{spatial_gcn_forward.1} parent=1 // pred_region
      %s76 = ssub.s32 128, 128
      %77 = vsyncadd [#allocation12], %s76
      %s79 = sshll.u32 [#allocation11], 4
      %s80 = int_to_ptr.vmem [resolvable:$true] %s79
      %82 = dma.hbm_to_vmem [thread:$0]  %s5, 128, %s80, [#allocation12]
    $region25: #{spatial_gcn_forward.1} parent=1 // pred_fallthru
      _
    // Predicated region
    $region26: #{spatial_gcn_forward.1} parent=1 // pred_check
      _
    $region27: #{spatial_gcn_forward.1} parent=1 // pred_check_branch
      %84 = sbr.rel (0) target = $region29
    $region28: #{spatial_gcn_forward.1} parent=1 // pred_region
      %s86 = ssub.s32 128, 128
      %87 = vsyncadd [#allocation12], %s86
      %s89 = sshll.u32 [#allocation13], 4
      %s90 = int_to_ptr.vmem [resolvable:$true] %s89
      %92 = dma.hbm_to_vmem [thread:$0]  %s6, 128, %s90, [#allocation12]
    $region29: #{spatial_gcn_forward.1} parent=1 // pred_fallthru
      _
    // Predicated region
    $region30: #{spatial_gcn_forward.1} parent=1 // pred_check
      _
    $region31: #{spatial_gcn_forward.1} parent=1 // pred_check_branch
      %94 = sbr.rel (0) target = $region33
    $region32: #{spatial_gcn_forward.1} parent=1 // pred_region
      %95 = dma.done [#allocation3], 512
    $region33: #{spatial_gcn_forward.1} parent=1 // pred_fallthru
      _
    // Predicated region
    $region34: #{spatial_gcn_forward.1} parent=1 // pred_check
      _
    $region35: #{spatial_gcn_forward.1} parent=1 // pred_check_branch
      %97 = sbr.rel (0) target = $region37
    $region36: #{spatial_gcn_forward.1} parent=1 // pred_region
      %98 = dma.done [#allocation6], 256
    $region37: #{spatial_gcn_forward.1} parent=1 // pred_fallthru
      _
    // Predicated region
    $region38: #{spatial_gcn_forward.1} parent=1 // pred_check
      _
    $region39: #{spatial_gcn_forward.1} parent=1 // pred_check_branch
      %100 = sbr.rel (0) target = $region41
    $region40: #{spatial_gcn_forward.1} parent=1 // pred_region
      %101 = dma.done [#allocation6], 256
    $region41: #{spatial_gcn_forward.1} parent=1 // pred_fallthru
      _
    // Predicated region
    $region42: #{spatial_gcn_forward.1} parent=1 // pred_check
      _
    $region43: #{spatial_gcn_forward.1} parent=1 // pred_check_branch
      %103 = sbr.rel (0) target = $region45
    $region44: #{spatial_gcn_forward.1} parent=1 // pred_region
      %104 = dma.done [#allocation9], 64
    $region45: #{spatial_gcn_forward.1} parent=1 // pred_fallthru
      _
    // Predicated region
    $region46: #{spatial_gcn_forward.1} parent=1 // pred_check
      _
    $region47: #{spatial_gcn_forward.1} parent=1 // pred_check_branch
      %106 = sbr.rel (0) target = $region49
    $region48: #{spatial_gcn_forward.1} parent=1 // pred_region
      %107 = dma.done [#allocation9], 64
    $region49: #{spatial_gcn_forward.1} parent=1 // pred_fallthru
      _
    // Predicated region
    $region50: #{spatial_gcn_forward.1} parent=1 // pred_check
      _
    $region51: #{spatial_gcn_forward.1} parent=1 // pred_check_branch
      %109 = sbr.rel (0) target = $region53
    $region52: #{spatial_gcn_forward.1} parent=1 // pred_region
      %110 = dma.done [#allocation12], 128
    $region53: #{spatial_gcn_forward.1} parent=1 // pred_fallthru
      _
    // Predicated region
    $region54: #{spatial_gcn_forward.1} parent=1 // pred_check
      _
    $region55: #{spatial_gcn_forward.1} parent=1 // pred_check_branch
      %112 = sbr.rel (0) target = $region57
    $region56: #{spatial_gcn_forward.1} parent=1 // pred_region
      %113 = dma.done [#allocation12], 128
    $region57: #{spatial_gcn_forward.1} parent=1 // pred_fallthru
      _
    %v114 = vld [vmem:[#allocation5] sm:$0xff]
    %v115 = vld [vmem:[#allocation5 + $0x8] sm:$0xf]
    %v116 = vld [vmem:[#allocation8] sm:$0xf]
    %v117 = vld [vmem:[#allocation11] sm:$0xff]
    %v118 = vld [vmem:[#allocation7] sm:$0xff]
    %v119 = vld [vmem:[#allocation7 + $0x8] sm:$0xf]
    %121 = vset.pattern.permute.xlu0 0
    %122 = vperm.xlu0 %121, %v118
    %v123 = vpop.permute.xlu0 %122
    %126 = vset.pattern.permute.xlu0 0
    %127 = vperm.xlu0 %126, %v119
    %v128 = vpop.permute.xlu0 %127
    %v130 = vld [vmem:[#allocation10] sm:$0xf]
    %132 = vset.pattern.permute.xlu0 0
    %133 = vperm.xlu0 %132, %v130
    %v134 = vpop.permute.xlu0 %133
    %v136 = vld [vmem:[#allocation13] sm:$0xff]
    %138 = vset.pattern.permute.xlu0 0
    %139 = vperm.xlu0 %138, %v136
    %v140 = vpop.permute.xlu0 %139
    %v142 = vld [vmem:[#allocation2] sm:$0xff]
    %v143 = vld [vmem:[#allocation2 + $0x8] sm:$0xff]
    %vm144 = vcmask 64512
    %v146 = vsel %vm144, %v114, 0
    %v149 = vsel %vm144, %v115, 0
    %151 = vmatprep.subr.mxu0 %v143
    %152 = vmatpush1.msra.mxu0 %v142
    %153 = vmatprep.subr.mxu0 0.0
    %154 = vmatpush1.msra.mxu0 0.0
    %155 = vmatprep.subr.mxu0 0.0
    %156 = vmatpush1.msra.mxu0 0.0
    %157 = vmatprep.subr.mxu0 0.0
    %158 = vmatpush1.msra.mxu0 0.0
    %159 = vmatprep.subr.mxu0 0.0
    %160 = vmatpush1.msra.mxu0 0.0
    %161 = vmatprep.subr.mxu0 0.0
    %162 = vmatpush1.msra.mxu0 0.0
    %163 = vmatprep.subr.mxu0 0.0
    %164 = vmatpush1.msra.mxu0 0.0
    %165 = vmatprep.subr.mxu0 0.0
    %166 = vmatpush1.msra.mxu0 0.0
    %167 = vmatprep.subr.mxu0 0.0
    %168 = vmatpush1.msra.mxu0 0.0
    %169 = vmatprep.subr.mxu0 0.0
    %170 = vmatpush1.msra.mxu0 0.0
    %171 = vmatprep.subr.mxu0 0.0
    %172 = vmatpush1.msra.mxu0 0.0
    %173 = vmatprep.subr.mxu0 0.0
    %174 = vmatpush1.msra.mxu0 0.0
    %175 = vmatprep.subr.mxu0 0.0
    %176 = vmatpush1.msra.mxu0 0.0
    %177 = vmatprep.subr.mxu0 0.0
    %178 = vmatpush1.msra.mxu0 0.0
    %179 = vmatprep.subr.mxu0 0.0
    %180 = vmatpush1.msra.mxu0 0.0
    %181 = vmatprep.subr.mxu0 0.0
    %182 = vmatpush1.msra.mxu0 0.0
    %183 = vmatprep.subr.mxu0 0.0
    %184 = vmatpush1.msra.mxu0 0.0
    %185 = vmatprep.subr.mxu0 0.0
    %186 = vmatpush1.msra.mxu0 0.0
    %187 = vmatprep.subr.mxu0 0.0
    %188 = vmatpush1.msra.mxu0 0.0
    %189 = vmatprep.subr.mxu0 0.0
    %190 = vmatpush1.msra.mxu0 0.0
    %191 = vmatprep.subr.mxu0 0.0
    %192 = vmatpush1.msra.mxu0 0.0
    %193 = vmatprep.subr.mxu0 0.0
    %194 = vmatpush1.msra.mxu0 0.0
    %195 = vmatprep.subr.mxu0 0.0
    %196 = vmatpush1.msra.mxu0 0.0
    %197 = vmatprep.subr.mxu0 0.0
    %198 = vmatpush1.msra.mxu0 0.0
    %199 = vmatprep.subr.mxu0 0.0
    %200 = vmatpush1.msra.mxu0 0.0
    %201 = vmatprep.subr.mxu0 0.0
    %202 = vmatpush1.msra.mxu0 0.0
    %203 = vmatprep.subr.mxu0 0.0
    %204 = vmatpush1.msra.mxu0 0.0
    %205 = vmatprep.subr.mxu0 0.0
    %206 = vmatpush1.msra.mxu0 0.0
    %207 = vmatprep.subr.mxu0 0.0
    %208 = vmatpush1.msra.mxu0 0.0
    %209 = vmatprep.subr.mxu0 0.0
    %210 = vmatpush1.msra.mxu0 0.0
    %211 = vmatprep.subr.mxu0 0.0
    %212 = vmatpush1.msra.mxu0 0.0
    %213 = vmatprep.subr.mxu0 0.0
    %214 = vmatpush1.msra.mxu0 0.0
    %215 = vmatprep.mubr.f32.mxu0 0.0
    %216 = vmatmul.mubr.f32.gmra.mrb[0].mxu0 %v146
    %v217 = vpop.f32.mrb[0].mxu0
    %v218 = vadd.f32 %v123, %v217
    %v219 = vpop.f32.mrb[0].mxu0
    %v220 = vadd.f32 %v123, %v219
    %221 = vmatprep.mubr.f32.mxu0 0.0
    %222 = vmatmul.mubr.f32.gmra.mrb[0].mxu0 %v149
    %v223 = vpop.f32.mrb[0].mxu0
    %v224 = vadd.f32 %v128, %v223
    %v225 = vpop.f32.mrb[0].mxu0
    %v226 = vadd.f32 %v128, %v225
    %227 = vdwg.mxu0
    %v230 = vrot.slane %v218, 4
    %v231 = vrot.slane %v220, 4
    %234 = vmatprep.subr.mxu0 %v226
    %235 = vmatpush1.xpose.msra.mxu0 %v224
    %236 = vmatprep.subr.mxu0 0.0
    %237 = vmatpush1.xpose.msra.mxu0 0.0
    %238 = vmatprep.subr.mxu0 0.0
    %239 = vmatpush1.xpose.msra.mxu0 0.0
    %240 = vmatprep.subr.mxu0 0.0
    %241 = vmatpush1.xpose.msra.mxu0 0.0
    %242 = vmatprep.subr.mxu0 0.0
    %243 = vmatpush1.xpose.msra.mxu0 0.0
    %244 = vmatprep.subr.mxu0 0.0
    %245 = vmatpush1.xpose.msra.mxu0 0.0
    %246 = vmatprep.subr.mxu0 0.0
    %247 = vmatpush1.xpose.msra.mxu0 0.0
    %248 = vmatprep.subr.mxu0 0.0
    %249 = vmatpush1.xpose.msra.mxu0 0.0
    %250 = vmatprep.subr.mxu0 0.0
    %251 = vmatpush1.xpose.msra.mxu0 0.0
    %252 = vmatprep.subr.mxu0 0.0
    %253 = vmatpush1.xpose.msra.mxu0 0.0
    %254 = vmatprep.subr.mxu0 0.0
    %255 = vmatpush1.xpose.msra.mxu0 0.0
    %256 = vmatprep.subr.mxu0 0.0
    %257 = vmatpush1.xpose.msra.mxu0 0.0
    %258 = vmatprep.subr.mxu0 0.0
    %259 = vmatpush1.xpose.msra.mxu0 0.0
    %260 = vmatprep.subr.mxu0 0.0
    %261 = vmatpush1.xpose.msra.mxu0 0.0
    %262 = vmatprep.subr.mxu0 0.0
    %263 = vmatpush1.xpose.msra.mxu0 0.0
    %264 = vmatprep.subr.mxu0 0.0
    %265 = vmatpush1.xpose.msra.mxu0 0.0
    %266 = vmatprep.subr.mxu0 0.0
    %267 = vmatpush1.xpose.msra.mxu0 0.0
    %268 = vmatprep.subr.mxu0 0.0
    %269 = vmatpush1.xpose.msra.mxu0 0.0
    %270 = vmatprep.subr.mxu0 0.0
    %271 = vmatpush1.xpose.msra.mxu0 0.0
    %272 = vmatprep.subr.mxu0 0.0
    %273 = vmatpush1.xpose.msra.mxu0 0.0
    %274 = vmatprep.subr.mxu0 0.0
    %275 = vmatpush1.xpose.msra.mxu0 0.0
    %276 = vmatprep.subr.mxu0 0.0
    %277 = vmatpush1.xpose.msra.mxu0 0.0
    %278 = vmatprep.subr.mxu0 0.0
    %279 = vmatpush1.xpose.msra.mxu0 0.0
    %280 = vmatprep.subr.mxu0 0.0
    %281 = vmatpush1.xpose.msra.mxu0 0.0
    %282 = vmatprep.subr.mxu0 0.0
    %283 = vmatpush1.xpose.msra.mxu0 0.0
    %284 = vmatprep.subr.mxu0 0.0
    %285 = vmatpush1.xpose.msra.mxu0 0.0
    %286 = vmatprep.subr.mxu0 0.0
    %287 = vmatpush1.xpose.msra.mxu0 0.0
    %288 = vmatprep.subr.mxu0 0.0
    %289 = vmatpush1.xpose.msra.mxu0 0.0
    %290 = vmatprep.subr.mxu0 0.0
    %291 = vmatpush1.xpose.msra.mxu0 0.0
    %292 = vmatprep.subr.mxu0 0.0
    %293 = vmatpush1.xpose.msra.mxu0 0.0
    %294 = vmatprep.subr.mxu0 0.0
    %295 = vmatpush1.xpose.msra.mxu0 0.0
    %296 = vmatprep.subr.mxu0 0.0
    %297 = vmatpush1.xpose.msra.mxu0 0.0
    %298 = vmatprep.mubr.f32.mxu0 %v231
    %299 = vmatmul.mubr.f32.gmra.mrb[0].mxu0 %v230
    %v300 = vpop.f32.mrb[0].mxu0
    %v301 = vadd.f32 0.0, %v300
    %v302 = vpop.f32.mrb[0].mxu0
    %303 = vdwg.mxu0
    %vm304 = vcmask 27648
    %v305 = vsel %vm304, %v301, -inf
    %306 = vmax.xlane.f32.xlu0 %v305
    %v307 = vpop.xlane.xlu0 %306
    %v308 = vsub.f32 %v301, %v307
    %v309 = vmul.f32 %v308, 1.442695
    %v310 = vpow.pop %v309
    %v311 = vsel %vm304, %v310, 0.0
    %312 = vadd.xlane.f32.xlu0 %v311
    %v313 = vpop.xlane.xlu0 %312
    %v314 = vrcp.pop %v313
    %v315 = vmul.f32 %v310, %v314
    %316 = vxpose.xlu0.b32.start [1/16] %v315, 128
    %317 = vxpose.xlu0.b32.cont [2/16] 0.0, 128
    %318 = vxpose.xlu0.b32.cont [3/16] 0.0, 128
    %319 = vxpose.xlu0.b32.cont [4/16] 0.0, 128
    %320 = vxpose.xlu0.b32.cont [5/16] 0.0, 128
    %321 = vxpose.xlu0.b32.cont [6/16] 0.0, 128
    %322 = vxpose.xlu0.b32.cont [7/16] 0.0, 128
    %323 = vxpose.xlu0.b32.cont [8/16] 0.0, 128
    %324 = vxpose.xlu0.b32.cont [9/16] 0.0, 128
    %325 = vxpose.xlu0.b32.cont [10/16] 0.0, 128
    %326 = vxpose.xlu0.b32.cont [11/16] 0.0, 128
    %327 = vxpose.xlu0.b32.cont [12/16] 0.0, 128
    %328 = vxpose.xlu0.b32.cont [13/16] 0.0, 128
    %329 = vxpose.xlu0.b32.cont [14/16] 0.0, 128
    %330 = vxpose.xlu0.b32.cont [15/16] 0.0, 128
    %331 = vxpose.xlu0.b32.end [16/16] 0.0, 128
    %v332 = vpop.trf.xlu0
    %v333 = vpop.trf.xlu0
    %v334 = vpop.trf.xlu0
    %v335 = vpop.trf.xlu0
    %v336 = vpop.trf.xlu0
    %v337 = vpop.trf.xlu0
    %v338 = vpop.trf.xlu0
    %v339 = vpop.trf.xlu0
    %v340 = vpop.trf.xlu0
    %v341 = vpop.trf.xlu0
    %v342 = vpop.trf.xlu0
    %v343 = vpop.trf.xlu0
    %v344 = vpop.trf.xlu0
    %v345 = vpop.trf.xlu0
    %v346 = vpop.trf.xlu0
    %v347 = vpop.trf.xlu0
    %vm348 = vcmask 31744
    %v350 = vsel %vm348, %v332, 0
    %vm352 = vcmask 1043456
    %v353 = vsel %vm352, %v218, 0
    %v355 = vsel %vm352, %v220, 0
    %357 = vmatprep.subr.mxu0 %v355
    %358 = vmatpush1.msra.mxu0 %v353
    %359 = vmatprep.subr.mxu0 0.0
    %360 = vmatpush1.msra.mxu0 0.0
    %361 = vmatprep.subr.mxu0 0.0
    %362 = vmatpush1.msra.mxu0 0.0
    %363 = vmatprep.subr.mxu0 0.0
    %364 = vmatpush1.msra.mxu0 0.0
    %365 = vmatprep.subr.mxu0 0.0
    %366 = vmatpush1.msra.mxu0 0.0
    %367 = vmatprep.subr.mxu0 0.0
    %368 = vmatpush1.msra.mxu0 0.0
    %369 = vmatprep.subr.mxu0 0.0
    %370 = vmatpush1.msra.mxu0 0.0
    %371 = vmatprep.subr.mxu0 0.0
    %372 = vmatpush1.msra.mxu0 0.0
    %373 = vmatprep.subr.mxu0 0.0
    %374 = vmatpush1.msra.mxu0 0.0
    %375 = vmatprep.subr.mxu0 0.0
    %376 = vmatpush1.msra.mxu0 0.0
    %377 = vmatprep.subr.mxu0 0.0
    %378 = vmatpush1.msra.mxu0 0.0
    %379 = vmatprep.subr.mxu0 0.0
    %380 = vmatpush1.msra.mxu0 0.0
    %381 = vmatprep.subr.mxu0 0.0
    %382 = vmatpush1.msra.mxu0 0.0
    %383 = vmatprep.subr.mxu0 0.0
    %384 = vmatpush1.msra.mxu0 0.0
    %385 = vmatprep.subr.mxu0 0.0
    %386 = vmatpush1.msra.mxu0 0.0
    %387 = vmatprep.subr.mxu0 0.0
    %388 = vmatpush1.msra.mxu0 0.0
    %389 = vmatprep.subr.mxu0 0.0
    %390 = vmatpush1.msra.mxu0 0.0
    %391 = vmatprep.subr.mxu0 0.0
    %392 = vmatpush1.msra.mxu0 0.0
    %393 = vmatprep.subr.mxu0 0.0
    %394 = vmatpush1.msra.mxu0 0.0
    %395 = vmatprep.subr.mxu0 0.0
    %396 = vmatpush1.msra.mxu0 0.0
    %397 = vmatprep.subr.mxu0 0.0
    %398 = vmatpush1.msra.mxu0 0.0
    %399 = vmatprep.subr.mxu0 0.0
    %400 = vmatpush1.msra.mxu0 0.0
    %401 = vmatprep.subr.mxu0 0.0
    %402 = vmatpush1.msra.mxu0 0.0
    %403 = vmatprep.subr.mxu0 0.0
    %404 = vmatpush1.msra.mxu0 0.0
    %405 = vmatprep.subr.mxu0 0.0
    %406 = vmatpush1.msra.mxu0 0.0
    %407 = vmatprep.subr.mxu0 0.0
    %408 = vmatpush1.msra.mxu0 0.0
    %409 = vmatprep.subr.mxu0 0.0
    %410 = vmatpush1.msra.mxu0 0.0
    %411 = vmatprep.subr.mxu0 0.0
    %412 = vmatpush1.msra.mxu0 0.0
    %413 = vmatprep.subr.mxu0 0.0
    %414 = vmatpush1.msra.mxu0 0.0
    %415 = vmatprep.subr.mxu0 0.0
    %416 = vmatpush1.msra.mxu0 0.0
    %417 = vmatprep.subr.mxu0 0.0
    %418 = vmatpush1.msra.mxu0 0.0
    %419 = vmatprep.subr.mxu0 0.0
    %420 = vmatpush1.msra.mxu0 0.0
    %421 = vmatprep.mubr.f32.mxu0 0.0
    %422 = vmatmul.mubr.f32.gmra.mrb[0].mxu0 %v350
    %v423 = vpop.f32.mrb[0].mxu0
    %v424 = vadd.f32 0.0, %v423
    %v425 = vpop.f32.mrb[0].mxu0
    %v426 = vadd.f32 0.0, %v425
    %427 = vdwg.mxu0
    %v429 = vsel %vm348, %v116, 0
    %v432 = vsel %vm352, %v424, 0
    %v435 = vsel %vm352, %v426, 0
    %437 = vmatprep.subr.mxu0 %v435
    %438 = vmatpush1.msra.mxu0 %v432
    %439 = vmatprep.subr.mxu0 0.0
    %440 = vmatpush1.msra.mxu0 0.0
    %441 = vmatprep.subr.mxu0 0.0
    %442 = vmatpush1.msra.mxu0 0.0
    %443 = vmatprep.subr.mxu0 0.0
    %444 = vmatpush1.msra.mxu0 0.0
    %445 = vmatprep.subr.mxu0 0.0
    %446 = vmatpush1.msra.mxu0 0.0
    %447 = vmatprep.subr.mxu0 0.0
    %448 = vmatpush1.msra.mxu0 0.0
    %449 = vmatprep.subr.mxu0 0.0
    %450 = vmatpush1.msra.mxu0 0.0
    %451 = vmatprep.subr.mxu0 0.0
    %452 = vmatpush1.msra.mxu0 0.0
    %453 = vmatprep.subr.mxu0 0.0
    %454 = vmatpush1.msra.mxu0 0.0
    %455 = vmatprep.subr.mxu0 0.0
    %456 = vmatpush1.msra.mxu0 0.0
    %457 = vmatprep.subr.mxu0 0.0
    %458 = vmatpush1.msra.mxu0 0.0
    %459 = vmatprep.subr.mxu0 0.0
    %460 = vmatpush1.msra.mxu0 0.0
    %461 = vmatprep.subr.mxu0 0.0
    %462 = vmatpush1.msra.mxu0 0.0
    %463 = vmatprep.subr.mxu0 0.0
    %464 = vmatpush1.msra.mxu0 0.0
    %465 = vmatprep.subr.mxu0 0.0
    %466 = vmatpush1.msra.mxu0 0.0
    %467 = vmatprep.subr.mxu0 0.0
    %468 = vmatpush1.msra.mxu0 0.0
    %469 = vmatprep.subr.mxu0 0.0
    %470 = vmatpush1.msra.mxu0 0.0
    %471 = vmatprep.subr.mxu0 0.0
    %472 = vmatpush1.msra.mxu0 0.0
    %473 = vmatprep.subr.mxu0 0.0
    %474 = vmatpush1.msra.mxu0 0.0
    %475 = vmatprep.subr.mxu0 0.0
    %476 = vmatpush1.msra.mxu0 0.0
    %477 = vmatprep.subr.mxu0 0.0
    %478 = vmatpush1.msra.mxu0 0.0
    %479 = vmatprep.subr.mxu0 0.0
    %480 = vmatpush1.msra.mxu0 0.0
    %481 = vmatprep.subr.mxu0 0.0
    %482 = vmatpush1.msra.mxu0 0.0
    %483 = vmatprep.subr.mxu0 0.0
    %484 = vmatpush1.msra.mxu0 0.0
    %485 = vmatprep.subr.mxu0 0.0
    %486 = vmatpush1.msra.mxu0 0.0
    %487 = vmatprep.subr.mxu0 0.0
    %488 = vmatpush1.msra.mxu0 0.0
    %489 = vmatprep.subr.mxu0 0.0
    %490 = vmatpush1.msra.mxu0 0.0
    %491 = vmatprep.subr.mxu0 0.0
    %492 = vmatpush1.msra.mxu0 0.0
    %493 = vmatprep.subr.mxu0 0.0
    %494 = vmatpush1.msra.mxu0 0.0
    %495 = vmatprep.subr.mxu0 0.0
    %496 = vmatpush1.msra.mxu0 0.0
    %497 = vmatprep.subr.mxu0 0.0
    %498 = vmatpush1.msra.mxu0 0.0
    %499 = vmatprep.subr.mxu0 0.0
    %500 = vmatpush1.msra.mxu0 0.0
    %501 = vmatprep.mubr.f32.mxu0 0.0
    %502 = vmatmul.mubr.f32.gmra.mrb[0].mxu0 %v429
    %v503 = vpop.f32.mrb[0].mxu0
    %v504 = vadd.f32 %v134, %v503
    %v505 = vpop.f32.mrb[0].mxu0
    %v506 = vadd.f32 %v134, %v505
    %507 = vdwg.mxu0
    %v509 = vsel %vm348, %v117, 0
    %v512 = vsel %vm352, %v504, 0
    %v515 = vsel %vm352, %v506, 0
    %517 = vmatprep.subr.mxu0 %v515
    %518 = vmatpush1.msra.mxu0 %v512
    %519 = vmatprep.subr.mxu0 0.0
    %520 = vmatpush1.msra.mxu0 0.0
    %521 = vmatprep.subr.mxu0 0.0
    %522 = vmatpush1.msra.mxu0 0.0
    %523 = vmatprep.subr.mxu0 0.0
    %524 = vmatpush1.msra.mxu0 0.0
    %525 = vmatprep.subr.mxu0 0.0
    %526 = vmatpush1.msra.mxu0 0.0
    %527 = vmatprep.subr.mxu0 0.0
    %528 = vmatpush1.msra.mxu0 0.0
    %529 = vmatprep.subr.mxu0 0.0
    %530 = vmatpush1.msra.mxu0 0.0
    %531 = vmatprep.subr.mxu0 0.0
    %532 = vmatpush1.msra.mxu0 0.0
    %533 = vmatprep.subr.mxu0 0.0
    %534 = vmatpush1.msra.mxu0 0.0
    %535 = vmatprep.subr.mxu0 0.0
    %536 = vmatpush1.msra.mxu0 0.0
    %537 = vmatprep.subr.mxu0 0.0
    %538 = vmatpush1.msra.mxu0 0.0
    %539 = vmatprep.subr.mxu0 0.0
    %540 = vmatpush1.msra.mxu0 0.0
    %541 = vmatprep.subr.mxu0 0.0
    %542 = vmatpush1.msra.mxu0 0.0
    %543 = vmatprep.subr.mxu0 0.0
    %544 = vmatpush1.msra.mxu0 0.0
    %545 = vmatprep.subr.mxu0 0.0
    %546 = vmatpush1.msra.mxu0 0.0
    %547 = vmatprep.subr.mxu0 0.0
    %548 = vmatpush1.msra.mxu0 0.0
    %549 = vmatprep.subr.mxu0 0.0
    %550 = vmatpush1.msra.mxu0 0.0
    %551 = vmatprep.subr.mxu0 0.0
    %552 = vmatpush1.msra.mxu0 0.0
    %553 = vmatprep.subr.mxu0 0.0
    %554 = vmatpush1.msra.mxu0 0.0
    %555 = vmatprep.subr.mxu0 0.0
    %556 = vmatpush1.msra.mxu0 0.0
    %557 = vmatprep.subr.mxu0 0.0
    %558 = vmatpush1.msra.mxu0 0.0
    %559 = vmatprep.subr.mxu0 0.0
    %560 = vmatpush1.msra.mxu0 0.0
    %561 = vmatprep.subr.mxu0 0.0
    %562 = vmatpush1.msra.mxu0 0.0
    %563 = vmatprep.subr.mxu0 0.0
    %564 = vmatpush1.msra.mxu0 0.0
    %565 = vmatprep.subr.mxu0 0.0
    %566 = vmatpush1.msra.mxu0 0.0
    %567 = vmatprep.subr.mxu0 0.0
    %568 = vmatpush1.msra.mxu0 0.0
    %569 = vmatprep.subr.mxu0 0.0
    %570 = vmatpush1.msra.mxu0 0.0
    %571 = vmatprep.subr.mxu0 0.0
    %572 = vmatpush1.msra.mxu0 0.0
    %573 = vmatprep.subr.mxu0 0.0
    %574 = vmatpush1.msra.mxu0 0.0
    %575 = vmatprep.subr.mxu0 0.0
    %576 = vmatpush1.msra.mxu0 0.0
    %577 = vmatprep.subr.mxu0 0.0
    %578 = vmatpush1.msra.mxu0 0.0
    %579 = vmatprep.subr.mxu0 0.0
    %580 = vmatpush1.msra.mxu0 0.0
    %581 = vmatprep.mubr.f32.mxu0 0.0
    %582 = vmatmul.mubr.f32.gmra.mrb[0].mxu0 %v509
    %v583 = vpop.f32.mrb[0].mxu0
    %v584 = vadd.f32 %v140, %v583
    %v585 = vpop.f32.mrb[0].mxu0
    %v586 = vadd.f32 %v140, %v585
    %587 = vdwg.mxu0
    %v588 = vadd.f32 %v584, %v142
    %v589 = vadd.f32 %v586, %v143
    %v590 = vmax.f32 %v588, 0.0
    %v591 = vmax.f32 %v589, 0.0
    %592 = vst [vmem:[#allocation14] sm:$0xff] %v590
    %593 = vst [vmem:[#allocation14 + $0x8] sm:$0xff] %v591
    %s594 = scalar_lea.vmem [#allocation2], 16
    %v595 = vld [vmem:[%s594] sm:$0xff]
    %v596 = vld [vmem:[%s594 + $0x8] sm:$0xff]
    %597 = vmatprep.subr.mxu0 %v596
    %598 = vmatpush1.msra.mxu0 %v595
    %599 = vmatprep.subr.mxu0 0.0
    %600 = vmatpush1.msra.mxu0 0.0
    %601 = vmatprep.subr.mxu0 0.0
    %602 = vmatpush1.msra.mxu0 0.0
    %603 = vmatprep.subr.mxu0 0.0
    %604 = vmatpush1.msra.mxu0 0.0
    %605 = vmatprep.subr.mxu0 0.0
    %606 = vmatpush1.msra.mxu0 0.0
    %607 = vmatprep.subr.mxu0 0.0
    %608 = vmatpush1.msra.mxu0 0.0
    %609 = vmatprep.subr.mxu0 0.0
    %610 = vmatpush1.msra.mxu0 0.0
    %611 = vmatprep.subr.mxu0 0.0
    %612 = vmatpush1.msra.mxu0 0.0
    %613 = vmatprep.subr.mxu0 0.0
    %614 = vmatpush1.msra.mxu0 0.0
    %615 = vmatprep.subr.mxu0 0.0
    %616 = vmatpush1.msra.mxu0 0.0
    %617 = vmatprep.subr.mxu0 0.0
    %618 = vmatpush1.msra.mxu0 0.0
    %619 = vmatprep.subr.mxu0 0.0
    %620 = vmatpush1.msra.mxu0 0.0
    %621 = vmatprep.subr.mxu0 0.0
    %622 = vmatpush1.msra.mxu0 0.0
    %623 = vmatprep.subr.mxu0 0.0
    %624 = vmatpush1.msra.mxu0 0.0
    %625 = vmatprep.subr.mxu0 0.0
    %626 = vmatpush1.msra.mxu0 0.0
    %627 = vmatprep.subr.mxu0 0.0
    %628 = vmatpush1.msra.mxu0 0.0
    %629 = vmatprep.subr.mxu0 0.0
    %630 = vmatpush1.msra.mxu0 0.0
    %631 = vmatprep.subr.mxu0 0.0
    %632 = vmatpush1.msra.mxu0 0.0
    %633 = vmatprep.subr.mxu0 0.0
    %634 = vmatpush1.msra.mxu0 0.0
    %635 = vmatprep.subr.mxu0 0.0
    %636 = vmatpush1.msra.mxu0 0.0
    %637 = vmatprep.subr.mxu0 0.0
    %638 = vmatpush1.msra.mxu0 0.0
    %639 = vmatprep.subr.mxu0 0.0
    %640 = vmatpush1.msra.mxu0 0.0
    %641 = vmatprep.subr.mxu0 0.0
    %642 = vmatpush1.msra.mxu0 0.0
    %643 = vmatprep.subr.mxu0 0.0
    %644 = vmatpush1.msra.mxu0 0.0
    %645 = vmatprep.subr.mxu0 0.0
    %646 = vmatpush1.msra.mxu0 0.0
    %647 = vmatprep.subr.mxu0 0.0
    %648 = vmatpush1.msra.mxu0 0.0
    %649 = vmatprep.subr.mxu0 0.0
    %650 = vmatpush1.msra.mxu0 0.0
    %651 = vmatprep.subr.mxu0 0.0
    %652 = vmatpush1.msra.mxu0 0.0
    %653 = vmatprep.subr.mxu0 0.0
    %654 = vmatpush1.msra.mxu0 0.0
    %655 = vmatprep.subr.mxu0 0.0
    %656 = vmatpush1.msra.mxu0 0.0
    %657 = vmatprep.subr.mxu0 0.0
    %658 = vmatpush1.msra.mxu0 0.0
    %659 = vmatprep.subr.mxu0 0.0
    %660 = vmatpush1.msra.mxu0 0.0
    %661 = vmatprep.mubr.f32.mxu0 0.0
    %662 = vmatmul.mubr.f32.gmra.mrb[0].mxu0 %v146
    %v663 = vpop.f32.mrb[0].mxu0
    %v664 = vadd.f32 %v123, %v663
    %v665 = vpop.f32.mrb[0].mxu0
    %v666 = vadd.f32 %v123, %v665
    %667 = vmatprep.mubr.f32.mxu0 0.0
    %668 = vmatmul.mubr.f32.gmra.mrb[0].mxu0 %v149
    %v669 = vpop.f32.mrb[0].mxu0
    %v670 = vadd.f32 %v128, %v669
    %v671 = vpop.f32.mrb[0].mxu0
    %v672 = vadd.f32 %v128, %v671
    %673 = vdwg.mxu0
    %v676 = vrot.slane %v664, 4
    %v677 = vrot.slane %v666, 4
    %680 = vmatprep.subr.mxu0 %v672
    %681 = vmatpush1.xpose.msra.mxu0 %v670
    %682 = vmatprep.subr.mxu0 0.0
    %683 = vmatpush1.xpose.msra.mxu0 0.0
    %684 = vmatprep.subr.mxu0 0.0
    %685 = vmatpush1.xpose.msra.mxu0 0.0
    %686 = vmatprep.subr.mxu0 0.0
    %687 = vmatpush1.xpose.msra.mxu0 0.0
    %688 = vmatprep.subr.mxu0 0.0
    %689 = vmatpush1.xpose.msra.mxu0 0.0
    %690 = vmatprep.subr.mxu0 0.0
    %691 = vmatpush1.xpose.msra.mxu0 0.0
    %692 = vmatprep.subr.mxu0 0.0
    %693 = vmatpush1.xpose.msra.mxu0 0.0
    %694 = vmatprep.subr.mxu0 0.0
    %695 = vmatpush1.xpose.msra.mxu0 0.0
    %696 = vmatprep.subr.mxu0 0.0
    %697 = vmatpush1.xpose.msra.mxu0 0.0
    %698 = vmatprep.subr.mxu0 0.0
    %699 = vmatpush1.xpose.msra.mxu0 0.0
    %700 = vmatprep.subr.mxu0 0.0
    %701 = vmatpush1.xpose.msra.mxu0 0.0
    %702 = vmatprep.subr.mxu0 0.0
    %703 = vmatpush1.xpose.msra.mxu0 0.0
    %704 = vmatprep.subr.mxu0 0.0
    %705 = vmatpush1.xpose.msra.mxu0 0.0
    %706 = vmatprep.subr.mxu0 0.0
    %707 = vmatpush1.xpose.msra.mxu0 0.0
    %708 = vmatprep.subr.mxu0 0.0
    %709 = vmatpush1.xpose.msra.mxu0 0.0
    %710 = vmatprep.subr.mxu0 0.0
    %711 = vmatpush1.xpose.msra.mxu0 0.0
    %712 = vmatprep.subr.mxu0 0.0
    %713 = vmatpush1.xpose.msra.mxu0 0.0
    %714 = vmatprep.subr.mxu0 0.0
    %715 = vmatpush1.xpose.msra.mxu0 0.0
    %716 = vmatprep.subr.mxu0 0.0
    %717 = vmatpush1.xpose.msra.mxu0 0.0
    %718 = vmatprep.subr.mxu0 0.0
    %719 = vmatpush1.xpose.msra.mxu0 0.0
    %720 = vmatprep.subr.mxu0 0.0
    %721 = vmatpush1.xpose.msra.mxu0 0.0
    %722 = vmatprep.subr.mxu0 0.0
    %723 = vmatpush1.xpose.msra.mxu0 0.0
    %724 = vmatprep.subr.mxu0 0.0
    %725 = vmatpush1.xpose.msra.mxu0 0.0
    %726 = vmatprep.subr.mxu0 0.0
    %727 = vmatpush1.xpose.msra.mxu0 0.0
    %728 = vmatprep.subr.mxu0 0.0
    %729 = vmatpush1.xpose.msra.mxu0 0.0
    %730 = vmatprep.subr.mxu0 0.0
    %731 = vmatpush1.xpose.msra.mxu0 0.0
    %732 = vmatprep.subr.mxu0 0.0
    %733 = vmatpush1.xpose.msra.mxu0 0.0
    %734 = vmatprep.subr.mxu0 0.0
    %735 = vmatpush1.xpose.msra.mxu0 0.0
    %736 = vmatprep.subr.mxu0 0.0
    %737 = vmatpush1.xpose.msra.mxu0 0.0
    %738 = vmatprep.subr.mxu0 0.0
    %739 = vmatpush1.xpose.msra.mxu0 0.0
    %740 = vmatprep.subr.mxu0 0.0
    %741 = vmatpush1.xpose.msra.mxu0 0.0
    %742 = vmatprep.subr.mxu0 0.0
    %743 = vmatpush1.xpose.msra.mxu0 0.0
    %744 = vmatprep.mubr.f32.mxu0 %v677
    %745 = vmatmul.mubr.f32.gmra.mrb[0].mxu0 %v676
    %v746 = vpop.f32.mrb[0].mxu0
    %v747 = vadd.f32 0.0, %v746
    %v748 = vpop.f32.mrb[0].mxu0
    %749 = vdwg.mxu0
    %v750 = vsel %vm304, %v747, -inf
    %751 = vmax.xlane.f32.xlu0 %v750
    %v752 = vpop.xlane.xlu0 %751
    %v753 = vsub.f32 %v747, %v752
    %v754 = vmul.f32 %v753, 1.442695
    %v755 = vpow.pop %v754
    %v756 = vsel %vm304, %v755, 0.0
    %757 = vadd.xlane.f32.xlu0 %v756
    %v758 = vpop.xlane.xlu0 %757
    %v759 = vrcp.pop %v758
    %v760 = vmul.f32 %v755, %v759
    %761 = vxpose.xlu0.b32.start [1/16] %v760, 128
    %762 = vxpose.xlu0.b32.cont [2/16] 0.0, 128
    %763 = vxpose.xlu0.b32.cont [3/16] 0.0, 128
    %764 = vxpose.xlu0.b32.cont [4/16] 0.0, 128
    %765 = vxpose.xlu0.b32.cont [5/16] 0.0, 128
    %766 = vxpose.xlu0.b32.cont [6/16] 0.0, 128
    %767 = vxpose.xlu0.b32.cont [7/16] 0.0, 128
    %768 = vxpose.xlu0.b32.cont [8/16] 0.0, 128
    %769 = vxpose.xlu0.b32.cont [9/16] 0.0, 128
    %770 = vxpose.xlu0.b32.cont [10/16] 0.0, 128
    %771 = vxpose.xlu0.b32.cont [11/16] 0.0, 128
    %772 = vxpose.xlu0.b32.cont [12/16] 0.0, 128
    %773 = vxpose.xlu0.b32.cont [13/16] 0.0, 128
    %774 = vxpose.xlu0.b32.cont [14/16] 0.0, 128
    %775 = vxpose.xlu0.b32.cont [15/16] 0.0, 128
    %776 = vxpose.xlu0.b32.end [16/16] 0.0, 128
    %v777 = vpop.trf.xlu0
    %v778 = vpop.trf.xlu0
    %v779 = vpop.trf.xlu0
    %v780 = vpop.trf.xlu0
    %v781 = vpop.trf.xlu0
    %v782 = vpop.trf.xlu0
    %v783 = vpop.trf.xlu0
    %v784 = vpop.trf.xlu0
    %v785 = vpop.trf.xlu0
    %v786 = vpop.trf.xlu0
    %v787 = vpop.trf.xlu0
    %v788 = vpop.trf.xlu0
    %v789 = vpop.trf.xlu0
    %v790 = vpop.trf.xlu0
    %v791 = vpop.trf.xlu0
    %v792 = vpop.trf.xlu0
    %v794 = vsel %vm348, %v777, 0
    %v796 = vsel %vm352, %v664, 0
    %v798 = vsel %vm352, %v666, 0
    %800 = vmatprep.subr.mxu0 %v798
    %801 = vmatpush1.msra.mxu0 %v796
    %802 = vmatprep.subr.mxu0 0.0
    %803 = vmatpush1.msra.mxu0 0.0
    %804 = vmatprep.subr.mxu0 0.0
    %805 = vmatpush1.msra.mxu0 0.0
    %806 = vmatprep.subr.mxu0 0.0
    %807 = vmatpush1.msra.mxu0 0.0
    %808 = vmatprep.subr.mxu0 0.0
    %809 = vmatpush1.msra.mxu0 0.0
    %810 = vmatprep.subr.mxu0 0.0
    %811 = vmatpush1.msra.mxu0 0.0
    %812 = vmatprep.subr.mxu0 0.0
    %813 = vmatpush1.msra.mxu0 0.0
    %814 = vmatprep.subr.mxu0 0.0
    %815 = vmatpush1.msra.mxu0 0.0
    %816 = vmatprep.subr.mxu0 0.0
    %817 = vmatpush1.msra.mxu0 0.0
    %818 = vmatprep.subr.mxu0 0.0
    %819 = vmatpush1.msra.mxu0 0.0
    %820 = vmatprep.subr.mxu0 0.0
    %821 = vmatpush1.msra.mxu0 0.0
    %822 = vmatprep.subr.mxu0 0.0
    %823 = vmatpush1.msra.mxu0 0.0
    %824 = vmatprep.subr.mxu0 0.0
    %825 = vmatpush1.msra.mxu0 0.0
    %826 = vmatprep.subr.mxu0 0.0
    %827 = vmatpush1.msra.mxu0 0.0
    %828 = vmatprep.subr.mxu0 0.0
    %829 = vmatpush1.msra.mxu0 0.0
    %830 = vmatprep.subr.mxu0 0.0
    %831 = vmatpush1.msra.mxu0 0.0
    %832 = vmatprep.subr.mxu0 0.0
    %833 = vmatpush1.msra.mxu0 0.0
    %834 = vmatprep.subr.mxu0 0.0
    %835 = vmatpush1.msra.mxu0 0.0
    %836 = vmatprep.subr.mxu0 0.0
    %837 = vmatpush1.msra.mxu0 0.0
    %838 = vmatprep.subr.mxu0 0.0
    %839 = vmatpush1.msra.mxu0 0.0
    %840 = vmatprep.subr.mxu0 0.0
    %841 = vmatpush1.msra.mxu0 0.0
    %842 = vmatprep.subr.mxu0 0.0
    %843 = vmatpush1.msra.mxu0 0.0
    %844 = vmatprep.subr.mxu0 0.0
    %845 = vmatpush1.msra.mxu0 0.0
    %846 = vmatprep.subr.mxu0 0.0
    %847 = vmatpush1.msra.mxu0 0.0
    %848 = vmatprep.subr.mxu0 0.0
    %849 = vmatpush1.msra.mxu0 0.0
    %850 = vmatprep.subr.mxu0 0.0
    %851 = vmatpush1.msra.mxu0 0.0
    %852 = vmatprep.subr.mxu0 0.0
    %853 = vmatpush1.msra.mxu0 0.0
    %854 = vmatprep.subr.mxu0 0.0
    %855 = vmatpush1.msra.mxu0 0.0
    %856 = vmatprep.subr.mxu0 0.0
    %857 = vmatpush1.msra.mxu0 0.0
    %858 = vmatprep.subr.mxu0 0.0
    %859 = vmatpush1.msra.mxu0 0.0
    %860 = vmatprep.subr.mxu0 0.0
    %861 = vmatpush1.msra.mxu0 0.0
    %862 = vmatprep.subr.mxu0 0.0
    %863 = vmatpush1.msra.mxu0 0.0
    %864 = vmatprep.mubr.f32.mxu0 0.0
    %865 = vmatmul.mubr.f32.gmra.mrb[0].mxu0 %v794
    %v866 = vpop.f32.mrb[0].mxu0
    %v867 = vadd.f32 0.0, %v866
    %v868 = vpop.f32.mrb[0].mxu0
    %v869 = vadd.f32 0.0, %v868
    %870 = vdwg.mxu0
    %v872 = vsel %vm352, %v867, 0
    %v875 = vsel %vm352, %v869, 0
    %877 = vmatprep.subr.mxu0 %v875
    %878 = vmatpush1.msra.mxu0 %v872
    %879 = vmatprep.subr.mxu0 0.0
    %880 = vmatpush1.msra.mxu0 0.0
    %881 = vmatprep.subr.mxu0 0.0
    %882 = vmatpush1.msra.mxu0 0.0
    %883 = vmatprep.subr.mxu0 0.0
    %884 = vmatpush1.msra.mxu0 0.0
    %885 = vmatprep.subr.mxu0 0.0
    %886 = vmatpush1.msra.mxu0 0.0
    %887 = vmatprep.subr.mxu0 0.0
    %888 = vmatpush1.msra.mxu0 0.0
    %889 = vmatprep.subr.mxu0 0.0
    %890 = vmatpush1.msra.mxu0 0.0
    %891 = vmatprep.subr.mxu0 0.0
    %892 = vmatpush1.msra.mxu0 0.0
    %893 = vmatprep.subr.mxu0 0.0
    %894 = vmatpush1.msra.mxu0 0.0
    %895 = vmatprep.subr.mxu0 0.0
    %896 = vmatpush1.msra.mxu0 0.0
    %897 = vmatprep.subr.mxu0 0.0
    %898 = vmatpush1.msra.mxu0 0.0
    %899 = vmatprep.subr.mxu0 0.0
    %900 = vmatpush1.msra.mxu0 0.0
    %901 = vmatprep.subr.mxu0 0.0
    %902 = vmatpush1.msra.mxu0 0.0
    %903 = vmatprep.subr.mxu0 0.0
    %904 = vmatpush1.msra.mxu0 0.0
    %905 = vmatprep.subr.mxu0 0.0
    %906 = vmatpush1.msra.mxu0 0.0
    %907 = vmatprep.subr.mxu0 0.0
    %908 = vmatpush1.msra.mxu0 0.0
    %909 = vmatprep.subr.mxu0 0.0
    %910 = vmatpush1.msra.mxu0 0.0
    %911 = vmatprep.subr.mxu0 0.0
    %912 = vmatpush1.msra.mxu0 0.0
    %913 = vmatprep.subr.mxu0 0.0
    %914 = vmatpush1.msra.mxu0 0.0
    %915 = vmatprep.subr.mxu0 0.0
    %916 = vmatpush1.msra.mxu0 0.0
    %917 = vmatprep.subr.mxu0 0.0
    %918 = vmatpush1.msra.mxu0 0.0
    %919 = vmatprep.subr.mxu0 0.0
    %920 = vmatpush1.msra.mxu0 0.0
    %921 = vmatprep.subr.mxu0 0.0
    %922 = vmatpush1.msra.mxu0 0.0
    %923 = vmatprep.subr.mxu0 0.0
    %924 = vmatpush1.msra.mxu0 0.0
    %925 = vmatprep.subr.mxu0 0.0
    %926 = vmatpush1.msra.mxu0 0.0
    %927 = vmatprep.subr.mxu0 0.0
    %928 = vmatpush1.msra.mxu0 0.0
    %929 = vmatprep.subr.mxu0 0.0
    %930 = vmatpush1.msra.mxu0 0.0
    %931 = vmatprep.subr.mxu0 0.0
    %932 = vmatpush1.msra.mxu0 0.0
    %933 = vmatprep.subr.mxu0 0.0
    %934 = vmatpush1.msra.mxu0 0.0
    %935 = vmatprep.subr.mxu0 0.0
    %936 = vmatpush1.msra.mxu0 0.0
    %937 = vmatprep.subr.mxu0 0.0
    %938 = vmatpush1.msra.mxu0 0.0
    %939 = vmatprep.subr.mxu0 0.0
    %940 = vmatpush1.msra.mxu0 0.0
    %941 = vmatprep.mubr.f32.mxu0 0.0
    %942 = vmatmul.mubr.f32.gmra.mrb[0].mxu0 %v429
    %v943 = vpop.f32.mrb[0].mxu0
    %v944 = vadd.f32 %v134, %v943
    %v945 = vpop.f32.mrb[0].mxu0
    %v946 = vadd.f32 %v134, %v945
    %947 = vdwg.mxu0
    %v949 = vsel %vm352, %v944, 0
    %v952 = vsel %vm352, %v946, 0
    %954 = vmatprep.subr.mxu0 %v952
    %955 = vmatpush1.msra.mxu0 %v949
    %956 = vmatprep.subr.mxu0 0.0
    %957 = vmatpush1.msra.mxu0 0.0
    %958 = vmatprep.subr.mxu0 0.0
    %959 = vmatpush1.msra.mxu0 0.0
    %960 = vmatprep.subr.mxu0 0.0
    %961 = vmatpush1.msra.mxu0 0.0
    %962 = vmatprep.subr.mxu0 0.0
    %963 = vmatpush1.msra.mxu0 0.0
    %964 = vmatprep.subr.mxu0 0.0
    %965 = vmatpush1.msra.mxu0 0.0
    %966 = vmatprep.subr.mxu0 0.0
    %967 = vmatpush1.msra.mxu0 0.0
    %968 = vmatprep.subr.mxu0 0.0
    %969 = vmatpush1.msra.mxu0 0.0
    %970 = vmatprep.subr.mxu0 0.0
    %971 = vmatpush1.msra.mxu0 0.0
    %972 = vmatprep.subr.mxu0 0.0
    %973 = vmatpush1.msra.mxu0 0.0
    %974 = vmatprep.subr.mxu0 0.0
    %975 = vmatpush1.msra.mxu0 0.0
    %976 = vmatprep.subr.mxu0 0.0
    %977 = vmatpush1.msra.mxu0 0.0
    %978 = vmatprep.subr.mxu0 0.0
    %979 = vmatpush1.msra.mxu0 0.0
    %980 = vmatprep.subr.mxu0 0.0
    %981 = vmatpush1.msra.mxu0 0.0
    %982 = vmatprep.subr.mxu0 0.0
    %983 = vmatpush1.msra.mxu0 0.0
    %984 = vmatprep.subr.mxu0 0.0
    %985 = vmatpush1.msra.mxu0 0.0
    %986 = vmatprep.subr.mxu0 0.0
    %987 = vmatpush1.msra.mxu0 0.0
    %988 = vmatprep.subr.mxu0 0.0
    %989 = vmatpush1.msra.mxu0 0.0
    %990 = vmatprep.subr.mxu0 0.0
    %991 = vmatpush1.msra.mxu0 0.0
    %992 = vmatprep.subr.mxu0 0.0
    %993 = vmatpush1.msra.mxu0 0.0
    %994 = vmatprep.subr.mxu0 0.0
    %995 = vmatpush1.msra.mxu0 0.0
    %996 = vmatprep.subr.mxu0 0.0
    %997 = vmatpush1.msra.mxu0 0.0
    %998 = vmatprep.subr.mxu0 0.0
    %999 = vmatpush1.msra.mxu0 0.0
    %1000 = vmatprep.subr.mxu0 0.0
    %1001 = vmatpush1.msra.mxu0 0.0
    %1002 = vmatprep.subr.mxu0 0.0
    %1003 = vmatpush1.msra.mxu0 0.0
    %1004 = vmatprep.subr.mxu0 0.0
    %1005 = vmatpush1.msra.mxu0 0.0
    %1006 = vmatprep.subr.mxu0 0.0
    %1007 = vmatpush1.msra.mxu0 0.0
    %1008 = vmatprep.subr.mxu0 0.0
    %1009 = vmatpush1.msra.mxu0 0.0
    %1010 = vmatprep.subr.mxu0 0.0
    %1011 = vmatpush1.msra.mxu0 0.0
    %1012 = vmatprep.subr.mxu0 0.0
    %1013 = vmatpush1.msra.mxu0 0.0
    %1014 = vmatprep.subr.mxu0 0.0
    %1015 = vmatpush1.msra.mxu0 0.0
    %1016 = vmatprep.subr.mxu0 0.0
    %1017 = vmatpush1.msra.mxu0 0.0
    %1018 = vmatprep.mubr.f32.mxu0 0.0
    %1019 = vmatmul.mubr.f32.gmra.mrb[0].mxu0 %v509
    %v1020 = vpop.f32.mrb[0].mxu0
    %v1021 = vadd.f32 %v140, %v1020
    %v1022 = vpop.f32.mrb[0].mxu0
    %v1023 = vadd.f32 %v140, %v1022
    %1024 = vdwg.mxu0
    %v1025 = vadd.f32 %v1021, %v595
    %v1026 = vadd.f32 %v1023, %v596
    %v1027 = vmax.f32 %v1025, 0.0
    %v1028 = vmax.f32 %v1026, 0.0
    %s1029 = scalar_lea.vmem [#allocation14], 16
    %1030 = vst [vmem:[%s1029] sm:$0xff] %v1027
    %1031 = vst [vmem:[%s1029 + $0x8] sm:$0xff] %v1028
    // Predicated region
    $region58: #{spatial_gcn_forward.1} parent=1 // pred_check
      _
    $region59: #{spatial_gcn_forward.1} parent=1 // pred_check_branch
      %1033 = sbr.rel (0) target = $region61
    $region60: #{spatial_gcn_forward.1} parent=1 // pred_region
      %s1035 = ssub.s32 512, 512
      %1036 = vsyncadd [#allocation4], %s1035
      %s1037 = sshll.u32 [#allocation14], 4
      %s1038 = int_to_ptr.vmem [resolvable:$true] %s1037
      %1043 = dma.vmem_to_hbm [thread:$0]  %s1038, 512, %s7, [#allocation4], 256, 256, 16
    $region61: #{spatial_gcn_forward.1} parent=1 // pred_fallthru
      _
    // Predicated region
    $region62: #{spatial_gcn_forward.1} parent=1 // pred_check
      _
    $region63: #{spatial_gcn_forward.1} parent=1 // pred_check_branch
      %1045 = sbr.rel (0) target = $region65
    $region64: #{spatial_gcn_forward.1} parent=1 // pred_region
      %1046 = dma.done [#allocation4], 512
    $region65: #{spatial_gcn_forward.1} parent=1 // pred_fallthru
      _
    %1047 = vsyncpa [#allocation3], 1
    %1048 = vsyncpa [#allocation6], 1
    %1049 = vsyncpa [#allocation9], 1
    %1050 = vsyncpa [#allocation12], 1
    %1051 = vsyncpa [#allocation4], 1

</llo_original>
